<compile_context>
chip_gen: v7x
topology: tpu7x:2x2x1
jax: 0.10.0
libtpu: 0.0.40
codegen_flags: <defaults>
</compile_context>

<pallas_src>
import jax
import jax.numpy as jnp
from jax.experimental import pallas as pl
from jax.experimental.pallas import tpu as pltpu


def _round_up(x, m):
    return ((x + m - 1) // m) * m


# ---------------------------------------------------------------------------
# Kernel: one batch tile of the whole MLP (2 hidden layers + fused heads).
# ---------------------------------------------------------------------------
def actor_critic_kernel(x_ref, w1_ref, w2_ref, wh_ref, b_ref, out_ref):
    fc1 = w1_ref.shape[1]
    fc2 = w2_ref.shape[1]
    head = wh_ref.shape[1]

    x = x_ref[...]                                                       # (TB, Din) bf16

    # fc1 + ReLU (bf16 MXU, f32 accumulate, f32 epilogue)
    h1 = jnp.dot(x, w1_ref[...], preferred_element_type=jnp.float32)     # (TB, fc1)
    h1 = jnp.maximum(h1 + b_ref[0:1, :fc1], 0.0)

    # fc2 + ReLU
    h2 = jnp.dot(h1.astype(w2_ref.dtype), w2_ref[...],
                 preferred_element_type=jnp.float32)                     # (TB, fc2)
    h2 = jnp.maximum(h2 + b_ref[1:2, :fc2], 0.0)

    # fused actor+critic head -> lane-dense (TB, head_pad) slab
    out = jnp.dot(h2.astype(wh_ref.dtype), wh_ref[...],
                  preferred_element_type=jnp.float32)                    # (TB, head)
    out_ref[...] = (out + b_ref[2:3, :head]).astype(out_ref.dtype)


# ---------------------------------------------------------------------------
# Wrapper: pads batch/features, runs a batch-tiled grid, returns the padded
# lane-dense fused-head slab (bf16).  Downstream fused consumers should use
# this directly instead of re-slicing pi / v out of HBM.
# ---------------------------------------------------------------------------
def actor_critic_forward_fused(x, params, *, block_b=1024,
                               vmem_cap_bytes=48 * 1024 * 1024):
    """x: (B, input_dims) float32/bfloat16.  params: dict from pack_params().

    Returns the padded (B_pad, head_pad) bf16 output slab; columns
    [:n_actions] are pi logits, column [n_actions] is v.
    """
    B, d_in = x.shape
    w1, w2, wh, b_pack = params["w1"], params["w2"], params["wh"], params["b_pack"]
    d_in_pad, fc1 = w1.shape
    fc2 = w2.shape[1]
    head_pad = wh.shape[1]

    act_dtype = w1.dtype                    # bf16
    out_dtype = jnp.bfloat16

    # Zero-pad the feature axis to the packed weights' 128-lane width.
    if d_in_pad != d_in:
        x = jnp.pad(x, ((0, 0), (0, d_in_pad - d_in)))
    x = x.astype(act_dtype)

    # --- batch tile selection -------------------------------------------
    # >= 8 sublanes; prefer >= 2 grid steps so the "parallel" grid axis can
    # be sharded across both TensorCores on v7x.
    b8 = _round_up(B, 8)
    if b8 >= 16:
        tb = min(_round_up(int(block_b), 8), _round_up((b8 + 1) // 2, 8))
    else:
        tb = b8

    def est_vmem_bytes(tile_b):
        bpe = jnp.dtype(act_dtype).itemsize
        xbuf = 2 * tile_b * d_in_pad * bpe                         # double-buffered x
        obuf = 2 * tile_b * head_pad * jnp.dtype(out_dtype).itemsize
        wts = 2 * (w1.size + w2.size + wh.size) * bpe + 2 * b_pack.size * 4
        inter = tile_b * (fc1 + fc2 + head_pad) * 4                # f32 h1/h2/out
        return xbuf + obuf + wts + inter

    # Shrink the tile until the VMEM budget fits the cap (48 MiB default is
    # safe on v7x's 64 MiB physical VMEM; raise block_b / cap on v5e / v6e).
    while tb > 8 and est_vmem_bytes(tb) > vmem_cap_bytes:
        tb = _round_up(tb // 2, 8)

    b_pad = _round_up(B, tb)
    if b_pad != B:
        x = jnp.pad(x, ((0, b_pad - B), (0, 0)))

    grid = (b_pad // tb,)

    flops = 2 * b_pad * (d_in_pad * fc1 + fc1 * fc2 + fc2 * head_pad)
    bpe = jnp.dtype(act_dtype).itemsize
    bytes_accessed = (bpe * (x.size + w1.size + w2.size + wh.size)
                      + 4 * b_pack.size
                      + jnp.dtype(out_dtype).itemsize * b_pad * head_pad)

    out = pl.pallas_call(
        actor_critic_kernel,
        out_shape=jax.ShapeDtypeStruct((b_pad, head_pad), out_dtype),
        grid_spec=pltpu.PrefetchScalarGridSpec(
            num_scalar_prefetch=0,
            grid=grid,
            in_specs=[
                pl.BlockSpec((tb, d_in_pad), lambda i: (i, 0)),   # x tile (pipelined)
                pl.BlockSpec(w1.shape, lambda i: (0, 0)),         # resident
                pl.BlockSpec(w2.shape, lambda i: (0, 0)),         # resident
                pl.BlockSpec(wh.shape, lambda i: (0, 0)),         # resident
                pl.BlockSpec(b_pack.shape, lambda i: (0, 0)),     # resident
            ],
            out_specs=pl.BlockSpec((tb, head_pad), lambda i: (i, 0)),
        ),
        compiler_params=pltpu.CompilerParams(
            dimension_semantics=("parallel",),
            vmem_limit_bytes=int(vmem_cap_bytes),
        ),
        cost_estimate=pl.CostEstimate(
            flops=flops, transcendentals=0, bytes_accessed=int(bytes_accessed)),
    )(x, w1, w2, wh, b_pack)
    return out


def actor_critic_forward(x, params, **kwargs):
    """Module-compatible API: returns (pi, v) like ActorCriticNetwork.forward."""
    out = actor_critic_forward_fused(x, params, **kwargs)
    B = x.shape[0]
    n_actions = params["n_actions"]
    pi = out[:B, :n_actions]
    v = out[:B, n_actions:n_actions + 1]
    return pi, v


# ---------------------------------------------------------------------------
# Parameter construction.
# ---------------------------------------------------------------------------
def init_params(key, input_dims, fc1_dims, fc2_dims, n_actions):
    """PyTorch-Linear-style init U(-1/sqrt(fan_in), +). Returns raw f32 params."""
    def linear(key, fan_in, fan_out):
        kw, kb = jax.random.split(key)
        bound = 1.0 / jnp.sqrt(jnp.float32(fan_in))
        w = jax.random.uniform(kw, (fan_in, fan_out), jnp.float32, -bound, bound)
        b = jax.random.uniform(kb, (1, fan_out), jnp.float32, -bound, bound)
        return w, b

    k1, k2, k3, k4 = jax.random.split(key, 4)
    w1, b1 = linear(k1, input_dims, fc1_dims)
    w2, b2 = linear(k2, fc1_dims, fc2_dims)
    wpi, bpi = linear(k3, fc2_dims, n_actions)
    wv, bv = linear(k4, fc2_dims, 1)
    return {"w1": w1, "b1": b1, "w2": w2, "b2": b2,
            "wpi": wpi, "bpi": bpi, "wv": wv, "bv": bv}


def pack_params(raw, *, dtype=jnp.bfloat16):
    """Pad all matmul dims to 128 lanes, fuse pi||v head, pack biases, cast
    weights to bf16 (biases stay f32 for the f32 epilogue)."""
    w1, b1 = raw["w1"], raw["b1"]
    w2, b2 = raw["w2"], raw["b2"]
    wpi, bpi = raw["wpi"], raw["bpi"]
    wv, bv = raw["wv"], raw["bv"]

    d_in, fc1 = w1.shape
    fc2 = w2.shape[1]
    n_actions = wpi.shape[1]

    d_in_pad = _round_up(d_in, 128)
    fc1_pad = _round_up(fc1, 128)
    fc2_pad = _round_up(fc2, 128)
    head_pad = _round_up(n_actions + 1, 128)

    w1p = jnp.zeros((d_in_pad, fc1_pad), jnp.float32).at[:d_in, :fc1].set(w1)
    w2p = jnp.zeros((fc1_pad, fc2_pad), jnp.float32).at[:fc1, :fc2].set(w2)

    # Fused head weight (fc2_pad, head_pad): [:n_actions] = pi, [n_actions] = v,
    # remaining columns zero (free compute, lane-dense store).
    wh = jnp.zeros((fc2_pad, head_pad), jnp.float32)
    wh = wh.at[:fc2, :n_actions].set(wpi)
    wh = wh.at[:fc2, n_actions].set(wv[:, 0])

    # Packed biases (f32): row 0 = fc1, row 1 = fc2, row 2 = fused head.
    width = max(fc1_pad, fc2_pad, head_pad)
    b_pack = jnp.zeros((3, width), jnp.float32)
    b_pack = b_pack.at[0, :fc1].set(b1[0])
    b_pack = b_pack.at[1, :fc2].set(b2[0])
    b_pack = b_pack.at[2, :n_actions].set(bpi[0])
    b_pack = b_pack.at[2, n_actions].set(bv[0, 0])

    return {"w1": w1p.astype(dtype), "w2": w2p.astype(dtype),
            "wh": wh.astype(dtype), "b_pack": b_pack,
            "n_actions": n_actions, "input_dims": d_in}


if __name__ == "__main__":
    # Small shapes consistent with the module's Linear-stack forward.
    batch = 2
    input_dims = 16
    fc1_dims = 32
    fc2_dims = 32
    n_actions = 4

    key = jax.random.PRNGKey(0)
    k_obs, k_params = jax.random.split(key)

    obs = jax.random.normal(k_obs, (batch, input_dims), dtype=jnp.float32)
    raw = init_params(k_params, input_dims, fc1_dims, fc2_dims, n_actions)
    params = pack_params(raw)

    pi, v = actor_critic_forward(obs, params)
    jax.block_until_ready((pi, v))

    # Pure-JAX reference of the same math with bf16-rounded operands
    # (matches the kernel's bf16-input / f32-accumulate path).
    def bf(a):
        return a.astype(jnp.bfloat16).astype(jnp.float32)

    h1 = jnp.maximum(bf(obs) @ bf(raw["w1"]) + raw["b1"], 0.0)
    h2 = jnp.maximum(bf(h1) @ bf(raw["w2"]) + raw["b2"], 0.0)
    pi_ref = bf(h2) @ bf(raw["wpi"]) + raw["bpi"]
    v_ref = bf(h2) @ bf(raw["wv"]) + raw["bv"]

    assert pi.shape == (batch, n_actions) and v.shape == (batch, 1)
    assert jnp.allclose(pi.astype(jnp.float32), pi_ref, atol=2e-2, rtol=2e-2), "pi mismatch"
    assert jnp.allclose(v.astype(jnp.float32), v_ref, atol=2e-2, rtol=2e-2), "v mismatch"

    print("KERNEL_OK")
</pallas_src>

<mosaic_0001>
module attributes {stable_mosaic.version = 11 : i64} {
  func.func @actor_critic_kernel(%arg0: i32, %arg1: memref<8x128xbf16, #tpu.memory_space<vmem>>, %arg2: memref<128x128xbf16, #tpu.memory_space<vmem>>, %arg3: memref<128x128xbf16, #tpu.memory_space<vmem>>, %arg4: memref<128x128xbf16, #tpu.memory_space<vmem>>, %arg5: memref<3x128xf32, #tpu.memory_space<vmem>>, %arg6: memref<8x128xbf16, #tpu.memory_space<vmem>>) attributes {dimension_semantics = [#tpu.dimension_semantics<parallel>], iteration_bounds = array<i64: 1>, scalar_prefetch = 0 : i64, scratch_operands = 0 : i64, tpu.core_type = #tpu.core_type<tc>, window_params = [{transform_indices = @transform_0, window_bounds = array<i64: 8, 128>}, {pipeline_mode = #tpu.pipeline_mode<synchronous>, transform_indices = @transform_1, window_bounds = array<i64: 128, 128>}, {pipeline_mode = #tpu.pipeline_mode<synchronous>, transform_indices = @transform_2, window_bounds = array<i64: 128, 128>}, {pipeline_mode = #tpu.pipeline_mode<synchronous>, transform_indices = @transform_3, window_bounds = array<i64: 128, 128>}, {pipeline_mode = #tpu.pipeline_mode<synchronous>, transform_indices = @transform_4, window_bounds = array<i64: 3, 128>}, {transform_indices = @transform_5, window_bounds = array<i64: 8, 128>}]} {
    %c0 = arith.constant 0 : index
    %c0_0 = arith.constant 0 : index
    %0 = vector.load %arg1[%c0, %c0_0] : memref<8x128xbf16, #tpu.memory_space<vmem>>, vector<8x128xbf16>
    %c0_1 = arith.constant 0 : index
    %c0_2 = arith.constant 0 : index
    %1 = vector.load %arg2[%c0_1, %c0_2] : memref<128x128xbf16, #tpu.memory_space<vmem>>, vector<128x128xbf16>
    %cst = arith.constant dense<0.000000e+00> : vector<8x128xf32>
    %2 = tpu.matmul %0, %1, %cst {dimension_numbers = #tpu.dot_dimension_numbers<[1], [0], [0], [1], [0, 0, 1, 1], [], []>} : vector<8x128xbf16>, vector<128x128xbf16>, vector<8x128xf32> -> vector<8x128xf32>
    %c0_3 = arith.constant 0 : index
    %c0_4 = arith.constant 0 : index
    %3 = vector.load %arg5[%c0_3, %c0_4] : memref<3x128xf32, #tpu.memory_space<vmem>>, vector<1x128xf32>
    %4 = vector.broadcast %3 : vector<1x128xf32> to vector<8x128xf32>
    %5 = arith.addf %2, %4 : vector<8x128xf32>
    %cst_5 = arith.constant 0.000000e+00 : f32
    %6 = vector.broadcast %cst_5 : f32 to vector<8x128xf32>
    %7 = arith.maximumf %5, %6 : vector<8x128xf32>
    %8 = arith.truncf %7 : vector<8x128xf32> to vector<8x128xbf16>
    %c0_6 = arith.constant 0 : index
    %c0_7 = arith.constant 0 : index
    %9 = vector.load %arg3[%c0_6, %c0_7] : memref<128x128xbf16, #tpu.memory_space<vmem>>, vector<128x128xbf16>
    %cst_8 = arith.constant dense<0.000000e+00> : vector<8x128xf32>
    %10 = tpu.matmul %8, %9, %cst_8 {dimension_numbers = #tpu.dot_dimension_numbers<[1], [0], [0], [1], [0, 0, 1, 1], [], []>} : vector<8x128xbf16>, vector<128x128xbf16>, vector<8x128xf32> -> vector<8x128xf32>
    %c1 = arith.constant 1 : index
    %c0_9 = arith.constant 0 : index
    %11 = vector.load %arg5[%c1, %c0_9] : memref<3x128xf32, #tpu.memory_space<vmem>>, vector<1x128xf32>
    %12 = vector.broadcast %11 : vector<1x128xf32> to vector<8x128xf32>
    %13 = arith.addf %10, %12 : vector<8x128xf32>
    %cst_10 = arith.constant 0.000000e+00 : f32
    %14 = vector.broadcast %cst_10 : f32 to vector<8x128xf32>
    %15 = arith.maximumf %13, %14 : vector<8x128xf32>
    %16 = arith.truncf %15 : vector<8x128xf32> to vector<8x128xbf16>
    %c0_11 = arith.constant 0 : index
    %c0_12 = arith.constant 0 : index
    %17 = vector.load %arg4[%c0_11, %c0_12] : memref<128x128xbf16, #tpu.memory_space<vmem>>, vector<128x128xbf16>
    %cst_13 = arith.constant dense<0.000000e+00> : vector<8x128xf32>
    %18 = tpu.matmul %16, %17, %cst_13 {dimension_numbers = #tpu.dot_dimension_numbers<[1], [0], [0], [1], [0, 0, 1, 1], [], []>} : vector<8x128xbf16>, vector<128x128xbf16>, vector<8x128xf32> -> vector<8x128xf32>
    %c2 = arith.constant 2 : index
    %c0_14 = arith.constant 0 : index
    %19 = vector.load %arg5[%c2, %c0_14] : memref<3x128xf32, #tpu.memory_space<vmem>>, vector<1x128xf32>
    %20 = vector.broadcast %19 : vector<1x128xf32> to vector<8x128xf32>
    %21 = arith.addf %18, %20 : vector<8x128xf32>
    %22 = arith.truncf %21 : vector<8x128xf32> to vector<8x128xbf16>
    %c0_15 = arith.constant 0 : index
    %c0_16 = arith.constant 0 : index
    %23 = vector.load %arg6[%c0_15, %c0_16] : memref<8x128xbf16, #tpu.memory_space<vmem>>, vector<8x128xbf16>
    tpu.vector_store %arg6[%c0_15, %c0_16], %22 {strides = array<i32>} : memref<8x128xbf16, #tpu.memory_space<vmem>>, vector<8x128xbf16>,
    return
  }
  func.func @transform_0(%arg0: i32) -> (i32, i32) {
    %c0_i32 = arith.constant 0 : i32
    %c0_i32_0 = arith.constant 0 : i32
    return %arg0, %c0_i32 : i32, i32
  }
  func.func @transform_1(%arg0: i32) -> (i32, i32) {
    %c0_i32 = arith.constant 0 : i32
    %c0_i32_0 = arith.constant 0 : i32
    %c0_i32_1 = arith.constant 0 : i32
    return %c0_i32, %c0_i32_0 : i32, i32
  }
  func.func @transform_2(%arg0: i32) -> (i32, i32) {
    %c0_i32 = arith.constant 0 : i32
    %c0_i32_0 = arith.constant 0 : i32
    %c0_i32_1 = arith.constant 0 : i32
    return %c0_i32, %c0_i32_0 : i32, i32
  }
  func.func @transform_3(%arg0: i32) -> (i32, i32) {
    %c0_i32 = arith.constant 0 : i32
    %c0_i32_0 = arith.constant 0 : i32
    %c0_i32_1 = arith.constant 0 : i32
    return %c0_i32, %c0_i32_0 : i32, i32
  }
  func.func @transform_4(%arg0: i32) -> (i32, i32) {
    %c0_i32 = arith.constant 0 : i32
    %c0_i32_0 = arith.constant 0 : i32
    %c0_i32_1 = arith.constant 0 : i32
    return %c0_i32, %c0_i32_0 : i32, i32
  }
  func.func @transform_5(%arg0: i32) -> (i32, i32) {
    %c0_i32 = arith.constant 0 : i32
    %c0_i32_0 = arith.constant 0 : i32
    return %arg0, %c0_i32 : i32, i32
  }
}

</mosaic_0001>

<llo_original>
// kernel: tpu_custom_call.1
$region0: #{tpu_custom_call.1}
  #allocation0 [shape = 'u32[]', space=smem, size = 0x4, offset = 0x4, fixed_abs, tag = 'smem constant byte address 0x4 - core index']
  #allocation1 [shape = 'u32[144,128]{1,0:T(1,128)}', space=vmem, size = 0x12000, scoped, tag = 'internal scratch']
  %s0 = inlined_call_operand.hbm [shape: bf16[8,128], index: 0, kind: input, shape index: {}]
  %s1 = inlined_call_operand.hbm [shape: bf16[128,128], index: 1, kind: input, shape index: {}]
  %s2 = inlined_call_operand.hbm [shape: bf16[128,128], index: 2, kind: input, shape index: {}]
  %s3 = inlined_call_operand.hbm [shape: bf16[128,128], index: 3, kind: input, shape index: {}]
  %s4 = inlined_call_operand.vmem [shape: f32[3,128], index: 4, kind: input, shape index: {}]
  %s5 = inlined_call_operand.hbm [shape: bf16[8,128], index: 5, kind: output, shape index: {}]
  %s6 = sld [smem:[#allocation0]]
  $region46: #{tpu_custom_call.1} parent=0
    _
  %s8 = ssub.s32 1, %s6
  %s9 = scalar_select 0, %s8, %s6
  $region1: #{tpu_custom_call.1} parent=0
    #allocation2 [shape = 'u8[2048]{0}', space=vmem, size = 0x800, scoped, tag = 'input window, operand 0, single buffered']
    #allocation3 [shape = 's32[1]{0}', space=sflag, size = 0x4, scoped, tag = 'scoped memory for tpu_custom_call.1']
    #allocation4 [shape = 's32[1]{0}', space=sflag, size = 0x4, scoped, tag = 'scoped memory for tpu_custom_call.1']
    #allocation5 [shape = 'u8[32768]{0}', space=vmem, size = 0x8000, scoped, tag = 'input window, operand 1, single buffered']
    #allocation6 [shape = 's32[1]{0}', space=sflag, size = 0x4, scoped, tag = 'scoped memory for tpu_custom_call.1']
    #allocation7 [shape = 'u8[32768]{0}', space=vmem, size = 0x8000, scoped, tag = 'input window, operand 2, single buffered']
    #allocation8 [shape = 'u8[32768]{0}', space=vmem, size = 0x8000, scoped, tag = 'input window, operand 3, single buffered']
    #allocation9 [shape = 's32[1]{0}', space=sflag, size = 0x4, scoped, tag = 'scoped memory for tpu_custom_call.1']
    #allocation10 [shape = 'u8[2048]{0}', space=vmem, size = 0x800, scoped, tag = 'output window, operand 0, single buffered']
    %10 = vsyncpa [#allocation3], 0
    %11 = vsyncpa [#allocation6], 0
    %12 = vsyncpa [#allocation9], 0
    %13 = vsyncpa [#allocation4], 0
    // Predicated region
    $region2: #{tpu_custom_call.1} parent=1 // pred_check
      _
    $region3: #{tpu_custom_call.1} parent=1 // pred_check_branch
      %15 = sbr.rel (0) target = $region5
    $region4: #{tpu_custom_call.1} parent=1 // pred_region
      %s17 = ssub.s32 64, 64
      %18 = vsyncadd [#allocation3], %s17
      %s20 = sshll.u32 [#allocation2], 4
      %s21 = int_to_ptr.vmem [resolvable:$true] %s20
      %23 = dma.hbm_to_vmem [thread:$0]  %s0, 64, %s21, [#allocation3]
    $region5: #{tpu_custom_call.1} parent=1 // pred_fallthru
      _
    // Predicated region
    $region6: #{tpu_custom_call.1} parent=1 // pred_check
      _
    $region7: #{tpu_custom_call.1} parent=1 // pred_check_branch
      %25 = sbr.rel (0) target = $region9
    $region8: #{tpu_custom_call.1} parent=1 // pred_region
      %s27 = ssub.s32 1024, 1024
      %28 = vsyncadd [#allocation6], %s27
      %s29 = sshll.u32 [#allocation5], 4
      %s30 = int_to_ptr.vmem [resolvable:$true] %s29
      %35 = dma.hbm_to_vmem [thread:$0]  %s1, 1024, %s30, [#allocation6], 64, 64, 4
    $region9: #{tpu_custom_call.1} parent=1 // pred_fallthru
      _
    // Predicated region
    $region10: #{tpu_custom_call.1} parent=1 // pred_check
      _
    $region11: #{tpu_custom_call.1} parent=1 // pred_check_branch
      %37 = sbr.rel (0) target = $region13
    $region12: #{tpu_custom_call.1} parent=1 // pred_region
      %s39 = ssub.s32 1024, 1024
      %40 = vsyncadd [#allocation6], %s39
      %s41 = sshll.u32 [#allocation7], 4
      %s42 = int_to_ptr.vmem [resolvable:$true] %s41
      %47 = dma.hbm_to_vmem [thread:$0]  %s2, 1024, %s42, [#allocation6], 64, 64, 4
    $region13: #{tpu_custom_call.1} parent=1 // pred_fallthru
      _
    // Predicated region
    $region14: #{tpu_custom_call.1} parent=1 // pred_check
      _
    $region15: #{tpu_custom_call.1} parent=1 // pred_check_branch
      %49 = sbr.rel (0) target = $region17
    $region16: #{tpu_custom_call.1} parent=1 // pred_region
      %s51 = ssub.s32 1024, 1024
      %52 = vsyncadd [#allocation9], %s51
      %s53 = sshll.u32 [#allocation8], 4
      %s54 = int_to_ptr.vmem [resolvable:$true] %s53
      %59 = dma.hbm_to_vmem [thread:$0]  %s3, 1024, %s54, [#allocation9], 64, 64, 4
    $region17: #{tpu_custom_call.1} parent=1 // pred_fallthru
      _
    // Predicated region
    $region18: #{tpu_custom_call.1} parent=1 // pred_check
      _
    $region19: #{tpu_custom_call.1} parent=1 // pred_check_branch
      %61 = sbr.rel (0) target = $region21
    $region20: #{tpu_custom_call.1} parent=1 // pred_region
      _
    $region21: #{tpu_custom_call.1} parent=1 // pred_fallthru
      _
    // Predicated region
    $region22: #{tpu_custom_call.1} parent=1 // pred_check
      _
    $region23: #{tpu_custom_call.1} parent=1 // pred_check_branch
      %63 = sbr.rel (0) target = $region25
    $region24: #{tpu_custom_call.1} parent=1 // pred_region
      %64 = dma.done [#allocation3], 64
    $region25: #{tpu_custom_call.1} parent=1 // pred_fallthru
      _
    // Predicated region
    $region26: #{tpu_custom_call.1} parent=1 // pred_check
      _
    $region27: #{tpu_custom_call.1} parent=1 // pred_check_branch
      %66 = sbr.rel (0) target = $region29
    $region28: #{tpu_custom_call.1} parent=1 // pred_region
      %67 = dma.done [#allocation6], 1024
    $region29: #{tpu_custom_call.1} parent=1 // pred_fallthru
      _
    // Predicated region
    $region30: #{tpu_custom_call.1} parent=1 // pred_check
      _
    $region31: #{tpu_custom_call.1} parent=1 // pred_check_branch
      %69 = sbr.rel (0) target = $region33
    $region32: #{tpu_custom_call.1} parent=1 // pred_region
      %70 = dma.done [#allocation6], 1024
    $region33: #{tpu_custom_call.1} parent=1 // pred_fallthru
      _
    // Predicated region
    $region34: #{tpu_custom_call.1} parent=1 // pred_check
      _
    $region35: #{tpu_custom_call.1} parent=1 // pred_check_branch
      %72 = sbr.rel (0) target = $region37
    $region36: #{tpu_custom_call.1} parent=1 // pred_region
      %73 = dma.done [#allocation9], 1024
    $region37: #{tpu_custom_call.1} parent=1 // pred_fallthru
      _
    %v75 = vld [vmem:[#allocation2] sm:$0xf]
    %v76 = vld [vmem:[#allocation5] sm:$0xf]
    %v77 = vld [vmem:[#allocation5 + $0x4] sm:$0xf]
    %v78 = vld [vmem:[#allocation5 + $0x8] sm:$0xf]
    %v79 = vld [vmem:[#allocation5 + $0xc] sm:$0xf]
    %v80 = vld [vmem:[#allocation5 + $0x10] sm:$0xf]
    %v81 = vld [vmem:[#allocation5 + $0x14] sm:$0xf]
    %v82 = vld [vmem:[#allocation5 + $0x18] sm:$0xf]
    %v83 = vld [vmem:[#allocation5 + $0x1c] sm:$0xf]
    %v84 = vld [vmem:[#allocation5 + $0x20] sm:$0xf]
    %v85 = vld [vmem:[#allocation5 + $0x24] sm:$0xf]
    %v86 = vld [vmem:[#allocation5 + $0x28] sm:$0xf]
    %v87 = vld [vmem:[#allocation5 + $0x2c] sm:$0xf]
    %v88 = vld [vmem:[#allocation5 + $0x30] sm:$0xf]
    %v89 = vld [vmem:[#allocation5 + $0x34] sm:$0xf]
    %v90 = vld [vmem:[#allocation5 + $0x38] sm:$0xf]
    %v91 = vld [vmem:[#allocation5 + $0x3c] sm:$0xf]
    %v92 = vld [vmem:[%s4] sm:$0x1]
    %v93 = vlaneseq
    %v94 = vshrl.u32 %v93, 7
    %v95 = vsub.s32 0, %v94
    %v96 = vrot.slane %v92, %v95
    %v113 = vunpack.c.l.b16 %v76
    %v114 = vunpack.c.l.b16 %v77
    %v115 = vunpack.c.l.b16 %v78
    %v116 = vunpack.c.l.b16 %v79
    %v117 = vunpack.c.l.b16 %v80
    %v118 = vunpack.c.l.b16 %v81
    %v119 = vunpack.c.l.b16 %v82
    %v120 = vunpack.c.l.b16 %v83
    %v121 = vunpack.c.l.b16 %v84
    %v122 = vunpack.c.l.b16 %v85
    %v123 = vunpack.c.l.b16 %v86
    %v124 = vunpack.c.l.b16 %v87
    %v125 = vunpack.c.l.b16 %v88
    %v126 = vunpack.c.l.b16 %v89
    %v127 = vunpack.c.l.b16 %v90
    %v128 = vunpack.c.l.b16 %v91
    %v129 = vpack.c.b16 %v114, %v113
    %v130 = vpack.c.b16 %v116, %v115
    %v131 = vpack.c.b16 %v118, %v117
    %v132 = vpack.c.b16 %v120, %v119
    %v133 = vpack.c.b16 %v122, %v121
    %v134 = vpack.c.b16 %v124, %v123
    %v135 = vpack.c.b16 %v126, %v125
    %v136 = vpack.c.b16 %v128, %v127
    %145 = vmatprep.subr.bf16.mxu0 0
    %146 = vmatpush1.bf16.msra.mxu0 %v129
    %147 = vmatprep.subr.bf16.mxu0 0
    %148 = vmatpush1.bf16.msra.mxu0 %v130
    %149 = vmatprep.subr.bf16.mxu0 0
    %150 = vmatpush1.bf16.msra.mxu0 %v131
    %151 = vmatprep.subr.bf16.mxu0 0
    %152 = vmatpush1.bf16.msra.mxu0 %v132
    %153 = vmatprep.subr.bf16.mxu0 0
    %154 = vmatpush1.bf16.msra.mxu0 %v133
    %155 = vmatprep.subr.bf16.mxu0 0
    %156 = vmatpush1.bf16.msra.mxu0 %v134
    %157 = vmatprep.subr.bf16.mxu0 0
    %158 = vmatpush1.bf16.msra.mxu0 %v135
    %159 = vmatprep.subr.bf16.mxu0 0
    %160 = vmatpush1.bf16.msra.mxu0 %v136
    %161 = vmatprep.subr.bf16.mxu0 0
    %162 = vmatpush1.bf16.msra.mxu0 0
    %163 = vmatprep.subr.bf16.mxu0 0
    %164 = vmatpush1.bf16.msra.mxu0 0
    %165 = vmatprep.subr.bf16.mxu0 0
    %166 = vmatpush1.bf16.msra.mxu0 0
    %167 = vmatprep.subr.bf16.mxu0 0
    %168 = vmatpush1.bf16.msra.mxu0 0
    %169 = vmatprep.subr.bf16.mxu0 0
    %170 = vmatpush1.bf16.msra.mxu0 0
    %171 = vmatprep.subr.bf16.mxu0 0
    %172 = vmatpush1.bf16.msra.mxu0 0
    %173 = vmatprep.subr.bf16.mxu0 0
    %174 = vmatpush1.bf16.msra.mxu0 0
    %175 = vmatprep.subr.bf16.mxu0 0
    %176 = vmatpush1.bf16.msra.mxu0 0
    %177 = vmatprep.mubr.bf16.mxu0 0
    %178 = vmatmul.mubr.bf16.gmra.mrb[0].mxu0 %v75
    %v179 = vpop.f32.mrb[0].mxu0
    %v180 = vadd.f32 %v96, %v179
    %v181 = vpop.f32.mrb[0].mxu0
    %v182 = vpop.f32.mrb[0].mxu0
    %v183 = vpop.f32.mrb[0].mxu0
    %184 = vdwg.mxu0
    %v185 = vmax.f32 %v180, 0.0
    %v186 = vpack.c.bf16 %v185, %v185
    %v187 = vld [vmem:[#allocation7] sm:$0xf]
    %v188 = vld [vmem:[#allocation7 + $0x4] sm:$0xf]
    %v189 = vld [vmem:[#allocation7 + $0x8] sm:$0xf]
    %v190 = vld [vmem:[#allocation7 + $0xc] sm:$0xf]
    %v191 = vld [vmem:[#allocation7 + $0x10] sm:$0xf]
    %v192 = vld [vmem:[#allocation7 + $0x14] sm:$0xf]
    %v193 = vld [vmem:[#allocation7 + $0x18] sm:$0xf]
    %v194 = vld [vmem:[#allocation7 + $0x1c] sm:$0xf]
    %v195 = vld [vmem:[#allocation7 + $0x20] sm:$0xf]
    %v196 = vld [vmem:[#allocation7 + $0x24] sm:$0xf]
    %v197 = vld [vmem:[#allocation7 + $0x28] sm:$0xf]
    %v198 = vld [vmem:[#allocation7 + $0x2c] sm:$0xf]
    %v199 = vld [vmem:[#allocation7 + $0x30] sm:$0xf]
    %v200 = vld [vmem:[#allocation7 + $0x34] sm:$0xf]
    %v201 = vld [vmem:[#allocation7 + $0x38] sm:$0xf]
    %v202 = vld [vmem:[#allocation7 + $0x3c] sm:$0xf]
    %v203 = vld [vmem:[%s4 + $0x1] sm:$0x1]
    %v204 = vlaneseq
    %v205 = vshrl.u32 %v204, 7
    %v206 = vsub.s32 0, %v205
    %v207 = vrot.slane %v203, %v206
    %v224 = vunpack.c.l.b16 %v187
    %v225 = vunpack.c.l.b16 %v188
    %v226 = vunpack.c.l.b16 %v189
    %v227 = vunpack.c.l.b16 %v190
    %v228 = vunpack.c.l.b16 %v191
    %v229 = vunpack.c.l.b16 %v192
    %v230 = vunpack.c.l.b16 %v193
    %v231 = vunpack.c.l.b16 %v194
    %v232 = vunpack.c.l.b16 %v195
    %v233 = vunpack.c.l.b16 %v196
    %v234 = vunpack.c.l.b16 %v197
    %v235 = vunpack.c.l.b16 %v198
    %v236 = vunpack.c.l.b16 %v199
    %v237 = vunpack.c.l.b16 %v200
    %v238 = vunpack.c.l.b16 %v201
    %v239 = vunpack.c.l.b16 %v202
    %v240 = vpack.c.b16 %v225, %v224
    %v241 = vpack.c.b16 %v227, %v226
    %v242 = vpack.c.b16 %v229, %v228
    %v243 = vpack.c.b16 %v231, %v230
    %v244 = vpack.c.b16 %v233, %v232
    %v245 = vpack.c.b16 %v235, %v234
    %v246 = vpack.c.b16 %v237, %v236
    %v247 = vpack.c.b16 %v239, %v238
    %256 = vmatprep.subr.bf16.mxu0 0
    %257 = vmatpush1.bf16.msra.mxu0 %v240
    %258 = vmatprep.subr.bf16.mxu0 0
    %259 = vmatpush1.bf16.msra.mxu0 %v241
    %260 = vmatprep.subr.bf16.mxu0 0
    %261 = vmatpush1.bf16.msra.mxu0 %v242
    %262 = vmatprep.subr.bf16.mxu0 0
    %263 = vmatpush1.bf16.msra.mxu0 %v243
    %264 = vmatprep.subr.bf16.mxu0 0
    %265 = vmatpush1.bf16.msra.mxu0 %v244
    %266 = vmatprep.subr.bf16.mxu0 0
    %267 = vmatpush1.bf16.msra.mxu0 %v245
    %268 = vmatprep.subr.bf16.mxu0 0
    %269 = vmatpush1.bf16.msra.mxu0 %v246
    %270 = vmatprep.subr.bf16.mxu0 0
    %271 = vmatpush1.bf16.msra.mxu0 %v247
    %272 = vmatprep.subr.bf16.mxu0 0
    %273 = vmatpush1.bf16.msra.mxu0 0
    %274 = vmatprep.subr.bf16.mxu0 0
    %275 = vmatpush1.bf16.msra.mxu0 0
    %276 = vmatprep.subr.bf16.mxu0 0
    %277 = vmatpush1.bf16.msra.mxu0 0
    %278 = vmatprep.subr.bf16.mxu0 0
    %279 = vmatpush1.bf16.msra.mxu0 0
    %280 = vmatprep.subr.bf16.mxu0 0
    %281 = vmatpush1.bf16.msra.mxu0 0
    %282 = vmatprep.subr.bf16.mxu0 0
    %283 = vmatpush1.bf16.msra.mxu0 0
    %284 = vmatprep.subr.bf16.mxu0 0
    %285 = vmatpush1.bf16.msra.mxu0 0
    %286 = vmatprep.subr.bf16.mxu0 0
    %287 = vmatpush1.bf16.msra.mxu0 0
    %288 = vmatprep.mubr.bf16.mxu0 0
    %289 = vmatmul.mubr.bf16.gmra.mrb[0].mxu0 %v186
    %v290 = vpop.f32.mrb[0].mxu0
    %v291 = vadd.f32 %v207, %v290
    %v292 = vpop.f32.mrb[0].mxu0
    %v293 = vpop.f32.mrb[0].mxu0
    %v294 = vpop.f32.mrb[0].mxu0
    %295 = vdwg.mxu0
    %v296 = vmax.f32 %v291, 0.0
    %v297 = vpack.c.bf16 %v296, %v296
    %v298 = vld [vmem:[#allocation8] sm:$0xf]
    %v299 = vld [vmem:[#allocation8 + $0x4] sm:$0xf]
    %v300 = vld [vmem:[#allocation8 + $0x8] sm:$0xf]
    %v301 = vld [vmem:[#allocation8 + $0xc] sm:$0xf]
    %v302 = vld [vmem:[#allocation8 + $0x10] sm:$0xf]
    %v303 = vld [vmem:[#allocation8 + $0x14] sm:$0xf]
    %v304 = vld [vmem:[#allocation8 + $0x18] sm:$0xf]
    %v305 = vld [vmem:[#allocation8 + $0x1c] sm:$0xf]
    %v306 = vld [vmem:[#allocation8 + $0x20] sm:$0xf]
    %v307 = vld [vmem:[#allocation8 + $0x24] sm:$0xf]
    %v308 = vld [vmem:[#allocation8 + $0x28] sm:$0xf]
    %v309 = vld [vmem:[#allocation8 + $0x2c] sm:$0xf]
    %v310 = vld [vmem:[#allocation8 + $0x30] sm:$0xf]
    %v311 = vld [vmem:[#allocation8 + $0x34] sm:$0xf]
    %v312 = vld [vmem:[#allocation8 + $0x38] sm:$0xf]
    %v313 = vld [vmem:[#allocation8 + $0x3c] sm:$0xf]
    %v314 = vld [vmem:[%s4 + $0x2] sm:$0x1]
    %v315 = vlaneseq
    %v316 = vshrl.u32 %v315, 7
    %v317 = vsub.s32 0, %v316
    %v318 = vrot.slane %v314, %v317
    %v335 = vunpack.c.l.b16 %v298
    %v336 = vunpack.c.l.b16 %v299
    %v337 = vunpack.c.l.b16 %v300
    %v338 = vunpack.c.l.b16 %v301
    %v339 = vunpack.c.l.b16 %v302
    %v340 = vunpack.c.l.b16 %v303
    %v341 = vunpack.c.l.b16 %v304
    %v342 = vunpack.c.l.b16 %v305
    %v343 = vunpack.c.l.b16 %v306
    %v344 = vunpack.c.l.b16 %v307
    %v345 = vunpack.c.l.b16 %v308
    %v346 = vunpack.c.l.b16 %v309
    %v347 = vunpack.c.l.b16 %v310
    %v348 = vunpack.c.l.b16 %v311
    %v349 = vunpack.c.l.b16 %v312
    %v350 = vunpack.c.l.b16 %v313
    %v351 = vpack.c.b16 %v336, %v335
    %v352 = vpack.c.b16 %v338, %v337
    %v353 = vpack.c.b16 %v340, %v339
    %v354 = vpack.c.b16 %v342, %v341
    %v355 = vpack.c.b16 %v344, %v343
    %v356 = vpack.c.b16 %v346, %v345
    %v357 = vpack.c.b16 %v348, %v347
    %v358 = vpack.c.b16 %v350, %v349
    %367 = vmatprep.subr.bf16.mxu0 0
    %368 = vmatpush1.bf16.msra.mxu0 %v351
    %369 = vmatprep.subr.bf16.mxu0 0
    %370 = vmatpush1.bf16.msra.mxu0 %v352
    %371 = vmatprep.subr.bf16.mxu0 0
    %372 = vmatpush1.bf16.msra.mxu0 %v353
    %373 = vmatprep.subr.bf16.mxu0 0
    %374 = vmatpush1.bf16.msra.mxu0 %v354
    %375 = vmatprep.subr.bf16.mxu0 0
    %376 = vmatpush1.bf16.msra.mxu0 %v355
    %377 = vmatprep.subr.bf16.mxu0 0
    %378 = vmatpush1.bf16.msra.mxu0 %v356
    %379 = vmatprep.subr.bf16.mxu0 0
    %380 = vmatpush1.bf16.msra.mxu0 %v357
    %381 = vmatprep.subr.bf16.mxu0 0
    %382 = vmatpush1.bf16.msra.mxu0 %v358
    %383 = vmatprep.subr.bf16.mxu0 0
    %384 = vmatpush1.bf16.msra.mxu0 0
    %385 = vmatprep.subr.bf16.mxu0 0
    %386 = vmatpush1.bf16.msra.mxu0 0
    %387 = vmatprep.subr.bf16.mxu0 0
    %388 = vmatpush1.bf16.msra.mxu0 0
    %389 = vmatprep.subr.bf16.mxu0 0
    %390 = vmatpush1.bf16.msra.mxu0 0
    %391 = vmatprep.subr.bf16.mxu0 0
    %392 = vmatpush1.bf16.msra.mxu0 0
    %393 = vmatprep.subr.bf16.mxu0 0
    %394 = vmatpush1.bf16.msra.mxu0 0
    %395 = vmatprep.subr.bf16.mxu0 0
    %396 = vmatpush1.bf16.msra.mxu0 0
    %397 = vmatprep.subr.bf16.mxu0 0
    %398 = vmatpush1.bf16.msra.mxu0 0
    %399 = vmatprep.mubr.bf16.mxu0 0
    %400 = vmatmul.mubr.bf16.gmra.mrb[0].mxu0 %v297
    %v401 = vpop.f32.mrb[0].mxu0
    %v402 = vadd.f32 %v318, %v401
    %v403 = vpop.f32.mrb[0].mxu0
    %v404 = vpop.f32.mrb[0].mxu0
    %v405 = vpop.f32.mrb[0].mxu0
    %406 = vdwg.mxu0
    %v407 = vpack.c.bf16 %v402, %v402
    %408 = vst [vmem:[#allocation10] sm:$0xf] %v407
    // Predicated region
    $region38: #{tpu_custom_call.1} parent=1 // pred_check
      _
    $region39: #{tpu_custom_call.1} parent=1 // pred_check_branch
      %410 = sbr.rel (0) target = $region41
    $region40: #{tpu_custom_call.1} parent=1 // pred_region
      %s412 = ssub.s32 64, 64
      %413 = vsyncadd [#allocation4], %s412
      %s415 = sshll.u32 [#allocation10], 4
      %s416 = int_to_ptr.vmem [resolvable:$true] %s415
      %418 = dma.vmem_to_hbm [thread:$0]  %s416, 64, %s5, [#allocation4]
    $region41: #{tpu_custom_call.1} parent=1 // pred_fallthru
      _
    // Predicated region
    $region42: #{tpu_custom_call.1} parent=1 // pred_check
      _
    $region43: #{tpu_custom_call.1} parent=1 // pred_check_branch
      %420 = sbr.rel (0) target = $region45
    $region44: #{tpu_custom_call.1} parent=1 // pred_region
      %421 = dma.done [#allocation4], 64
    $region45: #{tpu_custom_call.1} parent=1 // pred_fallthru
      _
    %422 = vsyncpa [#allocation3], 1
    %423 = vsyncpa [#allocation6], 1
    %424 = vsyncpa [#allocation9], 1
    %425 = vsyncpa [#allocation4], 1

</llo_original>
